<compile_context>
chip_gen: v6e
topology: v6e:2x2x1
jax: 0.10.0
libtpu: 0.0.40
codegen_flags: <defaults>
</compile_context>

<pallas_src>
import functools

import jax
import jax.numpy as jnp
from jax import lax
from jax.experimental import pallas as pl
from jax.experimental.pallas import tpu as pltpu

NUM_GROUPS = 2
EPS = 1e-5

_LANES = 128
_SLAB_TARGET_BYTES = 8 * 1024 * 1024   # grow per-step slabs toward this size
_MAX_ROWS = 1024                       # cap slab sublane extent (bounds the P matrix)
_VMEM_HEADROOM = 16 * 1024 * 1024      # leave room for compiler-internal scratch


def _round_up(x, m):
    return (x + m - 1) // m * m


def _vmem_budget_bytes():
    """Generation-aware scoped-VMEM budget (~112 MiB on v5e/v6e, ~48 MiB on v7x)."""
    cap = None
    try:
        cap = int(pltpu.get_tpu_info().vmem_capacity_bytes)
    except Exception:
        cap = None
    if cap is None:
        try:
            kind = jax.devices()[0].device_kind.lower()
            cap = 64 * 1024 * 1024 if "v7" in kind else 128 * 1024 * 1024
        except Exception:
            cap = 64 * 1024 * 1024
    return max(int(cap) - _VMEM_HEADROOM, 32 * 1024 * 1024)


def _slab_step_bytes(rows, hw_pad, dtype_bytes):
    """Estimated per-grid-step VMEM of the resident-slab path (dtype-tight)."""
    slab = rows * hw_pad * dtype_bytes
    io = 2 * slab + 2 * slab                                   # dbl-buffered in + out
    temps = (1 if dtype_bytes >= 4 else 2) * rows * hw_pad * 4  # f32 working temps
    p_mat = 2 * rows * rows * 4                                 # block-diag ones matrix
    params = 4 * rows * 4                                       # gamma/beta columns
    return io + temps + p_mat + params + (1 << 20)


def _pick_samples_per_block(N, C, hw_pad, dtype_bytes, vmem_budget):
    """Pick samples-per-block (a divisor of N) by slab-byte target.

    Keeps n_blocks >= 2 whenever N >= 2 (so the 'parallel' grid axis can be
    sharded across v7x's two TensorCores), caps rows = spb*C so the segment
    reduce matrix stays tiny, and only accepts configs that fit the VMEM
    budget.  Returns None if even spb=1 does not fit -> caller uses the
    HW-tiled fallback.
    """
    divisors = [d for d in range(1, N + 1) if N % d == 0]
    cands = [d for d in divisors if N // d >= 2] or [1]
    cands = [d for d in cands
             if d * C <= max(_MAX_ROWS, C)
             and _slab_step_bytes(d * C, hw_pad, dtype_bytes) <= vmem_budget]
    if not cands:
        return None
    per_sample = C * hw_pad * dtype_bytes
    for d in cands:                      # smallest spb reaching the target => most blocks
        if d * per_sample >= _SLAB_TARGET_BYTES:
            return d
    return cands[-1]                     # largest slab that fits otherwise


# ----------------------------------------------------------------------------
# Resident-slab path
# ----------------------------------------------------------------------------
def _groupnorm_slab_kernel(x_ref, p_ref, gamma_ref, beta_ref, o_ref, *,
                           inv_n, hw_true, eps):
    # x_ref: (rows, hw_pad); p_ref: (rows, rows) block-diagonal ones matrix
    # (segment-sum + broadcast-back in one tiny MXU matmul);
    # gamma_ref/beta_ref: (rows, 1) f32; o_ref: (rows, hw_pad).
    xf = x_ref[...].astype(jnp.float32)          # no-op for f32 inputs
    rows, hw_pad = xf.shape

    # Pass 1: per-row sums, then per-group mean broadcast back per row.
    # Zero-padded lanes (if any) contribute nothing to the sum.
    row_sum = jnp.sum(xf, axis=1, keepdims=True)                       # (rows, 1)
    mean_r = jnp.dot(p_ref[...], row_sum,
                     preferred_element_type=jnp.float32) * inv_n       # (rows, 1)

    # Pass 2: centered sum of squares (exact two-pass variance, matches PyTorch;
    # no E[x^2]-mean^2 cancellation).  Padded lanes must be masked since
    # (0 - mean) != 0.
    d = xf - mean_r
    if hw_pad != hw_true:
        lane = lax.broadcasted_iota(jnp.int32, (rows, hw_pad), 1)
        d = jnp.where(lane < hw_true, d, 0.0)
    row_ss = jnp.sum(d * d, axis=1, keepdims=True)                     # (rows, 1)
    var_r = jnp.dot(p_ref[...], row_ss,
                    preferred_element_type=jnp.float32) * inv_n        # (rows, 1)
    inv_std_r = lax.rsqrt(var_r + eps)

    # Fold the affine into per-row scale/shift: out = x * scale + shift.
    scale = gamma_ref[...] * inv_std_r                                  # (rows, 1)
    shift = beta_ref[...] - mean_r * scale                              # (rows, 1)
    o_ref[...] = (xf * scale + shift).astype(o_ref.dtype)
    # TODO(synk): bf16 fast path on v6e/v7x — do the normalize multiply-add in
    # bf16 (upcast only scale/shift) to skip the f32 slab temporary.


def _groupnorm_slab(x4, gamma, beta, num_groups, eps, spb, hw_pad, vmem_budget):
    N, C, H, W = x4.shape
    hw = H * W
    cpg = C // num_groups
    rows = spb * C
    n_blocks = N // spb

    x_r = x4.reshape(N, C, hw)
    if hw_pad != hw:
        # Pad the lane dim to a multiple of 128 so output stores are unmasked vst.
        x_r = jnp.pad(x_r, ((0, 0), (0, 0), (0, hw_pad - hw)))
    x_r = x_r.reshape(n_blocks, rows, hw_pad)

    # Per-row affine params and block-diagonal group-membership matrix.
    # Rows are (sample_in_block, channel)-major, so every consecutive run of
    # `cpg` rows is exactly one (sample, group) — groups never mix samples.
    gamma_col = jnp.tile(gamma.astype(jnp.float32), spb).reshape(rows, 1)
    beta_col = jnp.tile(beta.astype(jnp.float32), spb).reshape(rows, 1)
    rid = jnp.arange(rows, dtype=jnp.int32) // cpg
    p_mat = (rid[:, None] == rid[None, :]).astype(jnp.float32)          # (rows, rows)

    kernel = functools.partial(
        _groupnorm_slab_kernel,
        inv_n=1.0 / float(cpg * hw), hw_true=hw, eps=eps)

    out = pl.pallas_call(
        kernel,
        out_shape=jax.ShapeDtypeStruct((n_blocks, rows, hw_pad), x4.dtype),
        grid_spec=pltpu.PrefetchScalarGridSpec(
            num_scalar_prefetch=0,
            grid=(n_blocks,),
            in_specs=[
                # one packed slab (spb samples, all groups) per grid step
                pl.BlockSpec((None, rows, hw_pad), lambda i: (i, 0, 0)),
                # resident (constant index map) segment matrix + affine columns
                pl.BlockSpec((rows, rows), lambda i: (0, 0)),
                pl.BlockSpec((rows, 1), lambda i: (0, 0)),
                pl.BlockSpec((rows, 1), lambda i: (0, 0)),
            ],
            out_specs=pl.BlockSpec((None, rows, hw_pad), lambda i: (i, 0, 0)),
        ),
        compiler_params=pltpu.CompilerParams(
            dimension_semantics=("parallel",),
            vmem_limit_bytes=int(vmem_budget),
        ),
    )(x_r, p_mat, gamma_col, beta_col)

    out = out.reshape(N, C, hw_pad)
    if hw_pad != hw:
        out = out[:, :, :hw]
    return out.reshape(N, C, H, W)


# ----------------------------------------------------------------------------
# HW-tiled two-pass fallback (slab does not fit VMEM, notably v7x 64 MiB)
# ----------------------------------------------------------------------------
def _gn_stats_kernel(x_ref, stats_ref):
    # Accumulate per-channel-row sum / sum-of-squares over hw tiles.
    @pl.when(pl.program_id(1) == 0)
    def _():
        stats_ref[...] = jnp.zeros_like(stats_ref)
    xf = x_ref[...].astype(jnp.float32)
    stats_ref[:, 0:1] += jnp.sum(xf, axis=1, keepdims=True)
    stats_ref[:, 1:2] += jnp.sum(xf * xf, axis=1, keepdims=True)


def _gn_norm_kernel(x_ref, scale_ref, shift_ref, o_ref):
    x = x_ref[...]
    o_ref[...] = (x * scale_ref[...].astype(x.dtype)
                  + shift_ref[...].astype(x.dtype)).astype(o_ref.dtype)


def _groupnorm_tiled(x4, gamma, beta, num_groups, eps, hw_pad, vmem_budget,
                     max_hw_tile=None):
    # Pass 1 streams sum / sum-of-squares per channel row; group stats and the
    # folded affine are computed in plain JAX (tiny); pass 2 streams normalize.
    # Costs one extra HBM read of x vs. the resident-slab path.
    # TODO(synk): use a shifted / Chan-combined sum-of-squares here if
    # E[x^2]-mean^2 cancellation ever matters for fallback-sized shapes.
    N, C, H, W = x4.shape
    hw = H * W
    cpg = C // num_groups
    dtype_bytes = jnp.dtype(x4.dtype).itemsize

    x_r = x4.reshape(N, C, hw)
    if hw_pad != hw:
        x_r = jnp.pad(x_r, ((0, 0), (0, 0), (0, hw_pad - hw)))

    # hw tile: multiple of 128 that divides hw_pad, targeting ~4 MiB slabs.
    m = hw_pad // _LANES
    mcap = m if max_hw_tile is None else max(1, min(m, max_hw_tile // _LANES))
    best_k = 1
    for k in range(1, mcap + 1):
        if m % k:
            continue
        tile = k * _LANES
        need = 4 * C * tile * dtype_bytes + C * tile * 4 + (1 << 20)
        if need <= vmem_budget and C * tile * dtype_bytes <= 4 * 1024 * 1024:
            best_k = k
    hw_tile = best_k * _LANES
    n_hw = hw_pad // hw_tile

    stats = pl.pallas_call(
        _gn_stats_kernel,
        out_shape=jax.ShapeDtypeStruct((N, C, 2), jnp.float32),
        grid_spec=pltpu.PrefetchScalarGridSpec(
            num_scalar_prefetch=0,
            grid=(N, n_hw),
            in_specs=[pl.BlockSpec((None, C, hw_tile), lambda n, j: (n, 0, j))],
            out_specs=pl.BlockSpec((None, C, 2), lambda n, j: (n, 0, 0)),
        ),
        compiler_params=pltpu.CompilerParams(
            dimension_semantics=("parallel", "arbitrary"),
            vmem_limit_bytes=int(vmem_budget),
        ),
    )(x_r)

    inv_n = 1.0 / float(cpg * hw)     # true element count (padded lanes are zeros)
    sums = stats[..., 0].reshape(N, num_groups, cpg).sum(axis=2)
    ssqs = stats[..., 1].reshape(N, num_groups, cpg).sum(axis=2)
    mean_g = sums * inv_n
    var_g = jnp.maximum(ssqs * inv_n - mean_g * mean_g, 0.0)
    inv_std_g = lax.rsqrt(var_g + eps)
    mean_c = jnp.repeat(mean_g, cpg, axis=1)                    # (N, C)
    inv_std_c = jnp.repeat(inv_std_g, cpg, axis=1)
    scale = gamma.astype(jnp.float32)[None, :] * inv_std_c
    shift = beta.astype(jnp.float32)[None, :] - mean_c * scale
    scale = scale[:, :, None]                                   # (N, C, 1)
    shift = shift[:, :, None]

    out = pl.pallas_call(
        _gn_norm_kernel,
        out_shape=jax.ShapeDtypeStruct((N, C, hw_pad), x4.dtype),
        grid_spec=pltpu.PrefetchScalarGridSpec(
            num_scalar_prefetch=0,
            grid=(N, n_hw),
            in_specs=[
                pl.BlockSpec((None, C, hw_tile), lambda n, j: (n, 0, j)),
                pl.BlockSpec((None, C, 1), lambda n, j: (n, 0, 0)),
                pl.BlockSpec((None, C, 1), lambda n, j: (n, 0, 0)),
            ],
            out_specs=pl.BlockSpec((None, C, hw_tile), lambda n, j: (n, 0, j)),
        ),
        compiler_params=pltpu.CompilerParams(
            dimension_semantics=("parallel", "parallel"),
            vmem_limit_bytes=int(vmem_budget),
        ),
    )(x_r, scale, shift)

    if hw_pad != hw:
        out = out[:, :, :hw]
    return out.reshape(N, C, H, W)


# ----------------------------------------------------------------------------
# Public entry point
# ----------------------------------------------------------------------------
def my_group_norm(x, gamma, beta, *, num_groups=NUM_GROUPS, eps=EPS,
                  force_tiled=False, max_hw_tile=None):
    """GroupNorm forward, matches nn.GroupNorm(num_groups, C, eps, affine=True).

    x: (N, C, H, W); gamma, beta: (C,)
    """
    N, C, H, W = x.shape
    assert C % num_groups == 0, "num_channels must be divisible by num_groups"
    hw = H * W
    hw_pad = _round_up(hw, _LANES)      # lane-dense output stores
    dtype_bytes = jnp.dtype(x.dtype).itemsize
    vmem_budget = _vmem_budget_bytes()

    spb = (None if force_tiled else
           _pick_samples_per_block(N, C, hw_pad, dtype_bytes, vmem_budget))
    if spb is None:
        return _groupnorm_tiled(x, gamma, beta, num_groups, eps, hw_pad,
                                vmem_budget, max_hw_tile=max_hw_tile)
    return _groupnorm_slab(x, gamma, beta, num_groups, eps, spb, hw_pad,
                           vmem_budget)


def _reference_group_norm(x, gamma, beta, *, num_groups=NUM_GROUPS, eps=EPS):
    N, C, H, W = x.shape
    cpg = C // num_groups
    xr = x.reshape(N, num_groups, cpg * H * W).astype(jnp.float32)
    mean = xr.mean(axis=-1, keepdims=True)
    var = ((xr - mean) ** 2).mean(axis=-1, keepdims=True)
    xn = (xr - mean) * lax.rsqrt(var + eps)
    xn = xn.reshape(N, C, H, W)
    return (xn * gamma[None, :, None, None] + beta[None, :, None, None]).astype(x.dtype)


if __name__ == "__main__":
    key = jax.random.PRNGKey(0)
    kx, kg, kb = jax.random.split(key, 3)

    N, C, H, W = 2, 4, 16, 16
    x = jax.random.normal(kx, (N, C, H, W), dtype=jnp.float32) * 2.0 + 0.5
    gamma = 1.0 + 0.1 * jax.random.normal(kg, (C,), dtype=jnp.float32)
    beta = 0.1 * jax.random.normal(kb, (C,), dtype=jnp.float32)

    ref = _reference_group_norm(x, gamma, beta)

    # Main (resident-slab) path.
    out = jax.block_until_ready(my_group_norm(x, gamma, beta))
    assert out.shape == (N, C, H, W)
    assert jnp.allclose(out, ref, atol=1e-5, rtol=1e-5), float(
        jnp.max(jnp.abs(out - ref)))

    # HW-tiled two-pass fallback path (forced, small hw tile to exercise
    # accumulation across hw tiles).
    out_t = jax.block_until_ready(
        my_group_norm(x, gamma, beta, force_tiled=True, max_hw_tile=128))
    assert jnp.allclose(out_t, ref, atol=1e-5, rtol=1e-5), float(
        jnp.max(jnp.abs(out_t - ref)))

    # Non-multiple-of-128 spatial size exercises the lane-padding path.
    x2 = jax.random.normal(jax.random.PRNGKey(1), (2, 4, 10, 10),
                           dtype=jnp.float32) * 1.5 - 0.25
    ref2 = _reference_group_norm(x2, gamma, beta)
    out2 = jax.block_until_ready(my_group_norm(x2, gamma, beta))
    assert jnp.allclose(out2, ref2, atol=1e-5, rtol=1e-5), float(
        jnp.max(jnp.abs(out2 - ref2)))

    print("KERNEL_OK")
</pallas_src>

<mosaic_0001>
module attributes {stable_mosaic.version = 11 : i64} {
  func.func @_groupnorm_slab_kernel(%arg0: i32, %arg1: memref<1x4x256xf32, #tpu.memory_space<vmem>>, %arg2: memref<4x4xf32, #tpu.memory_space<vmem>>, %arg3: memref<4x1xf32, #tpu.memory_space<vmem>>, %arg4: memref<4x1xf32, #tpu.memory_space<vmem>>, %arg5: memref<1x4x256xf32, #tpu.memory_space<vmem>>) attributes {dimension_semantics = [#tpu.dimension_semantics<parallel>], iteration_bounds = array<i64: 2>, scalar_prefetch = 0 : i64, scratch_operands = 0 : i64, tpu.core_type = #tpu.core_type<tc>, window_params = [{transform_indices = @transform_0, window_bounds = array<i64: 1, 4, 256>}, {pipeline_mode = #tpu.pipeline_mode<synchronous>, transform_indices = @transform_1, window_bounds = array<i64: 4, 4>}, {pipeline_mode = #tpu.pipeline_mode<synchronous>, transform_indices = @transform_2, window_bounds = array<i64: 4, 1>}, {pipeline_mode = #tpu.pipeline_mode<synchronous>, transform_indices = @transform_3, window_bounds = array<i64: 4, 1>}, {transform_indices = @transform_4, window_bounds = array<i64: 1, 4, 256>}]} {
    %c0 = arith.constant 0 : index
    %c0_0 = arith.constant 0 : index
    %c0_1 = arith.constant 0 : index
    %0 = vector.load %arg1[%c0, %c0_0, %c0_1] : memref<1x4x256xf32, #tpu.memory_space<vmem>>, vector<1x4x256xf32>
    %1 = vector.shape_cast %0 : vector<1x4x256xf32> to vector<4x256xf32>
    %cst = arith.constant dense<0.000000e+00> : vector<4xf32>
    %2 = vector.multi_reduction <add>, %1, %cst [1] : vector<4x256xf32> to vector<4xf32>
    %3 = vector.shape_cast %2 : vector<4xf32> to vector<4x1xf32>
    %c0_2 = arith.constant 0 : index
    %c0_3 = arith.constant 0 : index
    %4 = vector.load %arg2[%c0_2, %c0_3] : memref<4x4xf32, #tpu.memory_space<vmem>>, vector<4x4xf32>
    %cst_4 = arith.constant dense<0.000000e+00> : vector<4x1xf32>
    %5 = tpu.matmul %4, %3, %cst_4 {dimension_numbers = #tpu.dot_dimension_numbers<[1], [0], [0], [1], [0, 0, 1, 1], [], []>} : vector<4x4xf32>, vector<4x1xf32>, vector<4x1xf32> -> vector<4x1xf32>
    %cst_5 = arith.constant 0.001953125 : f32
    %6 = vector.broadcast %cst_5 : f32 to vector<4x1xf32>
    %7 = arith.mulf %5, %6 : vector<4x1xf32>
    %8 = vector.broadcast %7 : vector<4x1xf32> to vector<4x256xf32>
    %9 = arith.subf %1, %8 : vector<4x256xf32>
    %10 = arith.mulf %9, %9 : vector<4x256xf32>
    %cst_6 = arith.constant dense<0.000000e+00> : vector<4xf32>
    %11 = vector.multi_reduction <add>, %10, %cst_6 [1] : vector<4x256xf32> to vector<4xf32>
    %12 = vector.shape_cast %11 : vector<4xf32> to vector<4x1xf32>
    %c0_7 = arith.constant 0 : index
    %c0_8 = arith.constant 0 : index
    %13 = vector.load %arg2[%c0_7, %c0_8] : memref<4x4xf32, #tpu.memory_space<vmem>>, vector<4x4xf32>
    %cst_9 = arith.constant dense<0.000000e+00> : vector<4x1xf32>
    %14 = tpu.matmul %13, %12, %cst_9 {dimension_numbers = #tpu.dot_dimension_numbers<[1], [0], [0], [1], [0, 0, 1, 1], [], []>} : vector<4x4xf32>, vector<4x1xf32>, vector<4x1xf32> -> vector<4x1xf32>
    %cst_10 = arith.constant 0.001953125 : f32
    %15 = vector.broadcast %cst_10 : f32 to vector<4x1xf32>
    %16 = arith.mulf %14, %15 : vector<4x1xf32>
    %cst_11 = arith.constant 9.99999974E-6 : f32
    %17 = vector.broadcast %cst_11 : f32 to vector<4x1xf32>
    %18 = arith.addf %16, %17 : vector<4x1xf32>
    %19 = math.rsqrt %18 : vector<4x1xf32>
    %c0_12 = arith.constant 0 : index
    %c0_13 = arith.constant 0 : index
    %20 = vector.load %arg3[%c0_12, %c0_13] : memref<4x1xf32, #tpu.memory_space<vmem>>, vector<4x1xf32>
    %21 = arith.mulf %20, %19 : vector<4x1xf32>
    %c0_14 = arith.constant 0 : index
    %c0_15 = arith.constant 0 : index
    %22 = vector.load %arg4[%c0_14, %c0_15] : memref<4x1xf32, #tpu.memory_space<vmem>>, vector<4x1xf32>
    %23 = arith.mulf %7, %21 : vector<4x1xf32>
    %24 = arith.subf %22, %23 : vector<4x1xf32>
    %25 = vector.broadcast %21 : vector<4x1xf32> to vector<4x256xf32>
    %26 = arith.mulf %1, %25 : vector<4x256xf32>
    %27 = vector.broadcast %24 : vector<4x1xf32> to vector<4x256xf32>
    %28 = arith.addf %26, %27 : vector<4x256xf32>
    %c0_16 = arith.constant 0 : index
    %c0_17 = arith.constant 0 : index
    %c0_18 = arith.constant 0 : index
    %29 = vector.load %arg5[%c0_16, %c0_17, %c0_18] : memref<1x4x256xf32, #tpu.memory_space<vmem>>, vector<1x4x256xf32>
    %30 = vector.shape_cast %29 : vector<1x4x256xf32> to vector<4x256xf32>
    %31 = vector.shape_cast %28 : vector<4x256xf32> to vector<1x4x256xf32>
    tpu.vector_store %arg5[%c0_16, %c0_17, %c0_18], %31 {strides = array<i32>} : memref<1x4x256xf32, #tpu.memory_space<vmem>>, vector<1x4x256xf32>,
    return
  }
  func.func @transform_0(%arg0: i32) -> (i32, i32, i32) {
    %c0_i32 = arith.constant 0 : i32
    %c0_i32_0 = arith.constant 0 : i32
    %c0_i32_1 = arith.constant 0 : i32
    return %arg0, %c0_i32, %c0_i32_0 : i32, i32, i32
  }
  func.func @transform_1(%arg0: i32) -> (i32, i32) {
    %c0_i32 = arith.constant 0 : i32
    %c0_i32_0 = arith.constant 0 : i32
    %c0_i32_1 = arith.constant 0 : i32
    return %c0_i32, %c0_i32_0 : i32, i32
  }
  func.func @transform_2(%arg0: i32) -> (i32, i32) {
    %c0_i32 = arith.constant 0 : i32
    %c0_i32_0 = arith.constant 0 : i32
    %c0_i32_1 = arith.constant 0 : i32
    return %c0_i32, %c0_i32_0 : i32, i32
  }
  func.func @transform_3(%arg0: i32) -> (i32, i32) {
    %c0_i32 = arith.constant 0 : i32
    %c0_i32_0 = arith.constant 0 : i32
    %c0_i32_1 = arith.constant 0 : i32
    return %c0_i32, %c0_i32_0 : i32, i32
  }
  func.func @transform_4(%arg0: i32) -> (i32, i32, i32) {
    %c0_i32 = arith.constant 0 : i32
    %c0_i32_0 = arith.constant 0 : i32
    %c0_i32_1 = arith.constant 0 : i32
    return %arg0, %c0_i32, %c0_i32_0 : i32, i32, i32
  }
}

</mosaic_0001>

<llo_original>
// kernel: tpu_custom_call.1
$region0: #{tpu_custom_call.1}
  #allocation0 [shape = 'u32[]', space=smem, size = 0x4, offset = 0x4, fixed_abs, tag = 'smem constant byte address 0x4 - core index']
  #allocation1 [shape = 'u32[144,128]{1,0:T(1,128)}', space=vmem, size = 0x12000, scoped, tag = 'internal scratch']
  %s0 = inlined_call_operand.hbm [shape: f32[2,4,256], index: 0, kind: input, shape index: {}]
  %s1 = inlined_call_operand.vmem [shape: f32[4,4], index: 1, kind: input, shape index: {}]
  %s2 = inlined_call_operand.vmem [shape: f32[4,1], index: 2, kind: input, shape index: {}]
  %s3 = inlined_call_operand.vmem [shape: f32[4,1], index: 3, kind: input, shape index: {}]
  %s4 = inlined_call_operand.hbm [shape: f32[2,4,256], index: 4, kind: output, shape index: {}]
  %s5 = sld [smem:[#allocation0]]
  $region53: #{tpu_custom_call.1} parent=0
    _
  %s7 = ssub.s32 1, %s5
  %s8 = scalar_select 0, %s7, %s5
  $region1: #{tpu_custom_call.1} parent=0
    #allocation2 [shape = 'u8[8192]{0}', space=vmem, size = 0x2000, scoped, tag = 'input window, operand 0']
    #allocation3 [shape = 's32[2]{0}', space=sflag, size = 0x8, scoped, tag = 'scoped memory for tpu_custom_call.1']
    #allocation4 [shape = 's32[2]{0}', space=sflag, size = 0x8, scoped, tag = 'scoped memory for tpu_custom_call.1']
    #allocation5 [shape = 'u8[8192]{0}', space=vmem, size = 0x2000, scoped, tag = 'output window, operand 0']
    %9 = vsyncpa [#allocation3], 0
    %s10 = scalar_lea.sflag [#allocation3], 1
    %11 = vsyncpa %s10, 0
    %12 = vsyncpa [#allocation4], 0
    %s13 = scalar_lea.sflag [#allocation4], 1
    %14 = vsyncpa %s13, 0
    loop: start=0, step=1, limit=4
    $region2: #{tpu_custom_call.1} parent=1 // loop_pre_header
      _
    $region3: #{tpu_custom_call.1} parent=1 // loop_header
      %s16 = sphi 0, %s20
      %p17 = scmp.ge.s32.totalorder %s16, 4
      %s26 = sphi 0, %s28
      %s29 = sphi 0, %s26
      %s30 = sphi 0, %s29
      %s46 = sphi 0, %s30
      %s50 = sphi 0, %s50
      %s52 = sphi 0, %s50
      %s53 = sphi 0, %s52
      %s67 = sphi 0, %s53
      %s71 = sphi 0, %s71
      %s73 = sphi 0, %s71
      %s74 = sphi 0, %s73
      %s88 = sphi 0, %s74
      %s92 = sphi 0, %s92
      %s94 = sphi 0, %s92
      %s95 = sphi 0, %s94
      %s109 = sphi 0, %s95
      %s115 = sphi 0, %s117
      %s118 = sphi 0, %s115
      %s119 = sphi 0, %s118
      %s135 = sphi 0, %s119
    $region4: #{tpu_custom_call.1} parent=1 // loop_header_branch
      %19 = sbr.rel (%p17) target = $region8
    $region5: #{tpu_custom_call.1} parent=1 // loop_body
      %s21 = ssub.s32 %s16, 1
      %s22 = ssub.s32 %s16, 2
      %s23 = sadd.s32 %s16, 1
      %s24 = ssub.s32 %s16, %s23
      %p25 = scmp.eq.s32.totalorder %s24, 0
      %s27 = sadd.s32 %s26, 1
      %s28 = scalar_select %p25, %s26, %s27
      %p31 = pneg %p25
      %p32 = scmp.eq.s32.totalorder %s16, 1
      %p33 = por %p31, %p32
      %p34 = scmp.ne.s32.totalorder %s26, %s29
      %p35 = scmp.eq.s32.totalorder %s16, 0
      %p36 = por %p34, %p35
      %p37 = scmp.ne.s32.totalorder %s26, %s29
      %p38 = scmp.eq.s32.totalorder %s21, 1
      %p39 = por %p37, %p38
      %p40 = scmp.ne.s32.totalorder %s29, %s30
      %p41 = scmp.eq.s32.totalorder %s21, 0
      %p42 = por %p40, %p41
      %p43 = scmp.ne.s32.totalorder %s29, %s30
      %p44 = scmp.eq.s32.totalorder %s22, 1
      %p45 = por %p43, %p44
      %p47 = scmp.ne.s32.totalorder %s30, %s46
      %p48 = scmp.eq.s32.totalorder %s22, 0
      %p49 = por %p47, %p48
      %s51 = sadd.s32 %s50, 1
      %p54 = scmp.eq.s32.totalorder %s16, 1
      %p55 = scmp.ne.s32.totalorder %s50, %s52
      %p56 = scmp.eq.s32.totalorder %s16, 0
      %p57 = por %p55, %p56
      %p58 = scmp.ne.s32.totalorder %s50, %s52
      %p59 = scmp.eq.s32.totalorder %s21, 1
      %p60 = por %p58, %p59
      %p61 = scmp.ne.s32.totalorder %s52, %s53
      %p62 = scmp.eq.s32.totalorder %s21, 0
      %p63 = por %p61, %p62
      %p64 = scmp.ne.s32.totalorder %s52, %s53
      %p65 = scmp.eq.s32.totalorder %s22, 1
      %p66 = por %p64, %p65
      %p68 = scmp.ne.s32.totalorder %s53, %s67
      %p69 = scmp.eq.s32.totalorder %s22, 0
      %p70 = por %p68, %p69
      %s72 = sadd.s32 %s71, 1
      %p75 = scmp.eq.s32.totalorder %s16, 1
      %p76 = scmp.ne.s32.totalorder %s71, %s73
      %p77 = scmp.eq.s32.totalorder %s16, 0
      %p78 = por %p76, %p77
      %p79 = scmp.ne.s32.totalorder %s71, %s73
      %p80 = scmp.eq.s32.totalorder %s21, 1
      %p81 = por %p79, %p80
      %p82 = scmp.ne.s32.totalorder %s73, %s74
      %p83 = scmp.eq.s32.totalorder %s21, 0
      %p84 = por %p82, %p83
      %p85 = scmp.ne.s32.totalorder %s73, %s74
      %p86 = scmp.eq.s32.totalorder %s22, 1
      %p87 = por %p85, %p86
      %p89 = scmp.ne.s32.totalorder %s74, %s88
      %p90 = scmp.eq.s32.totalorder %s22, 0
      %p91 = por %p89, %p90
      %s93 = sadd.s32 %s92, 1
      %p96 = scmp.eq.s32.totalorder %s16, 1
      %p97 = scmp.ne.s32.totalorder %s92, %s94
      %p98 = scmp.eq.s32.totalorder %s16, 0
      %p99 = por %p97, %p98
      %p100 = scmp.ne.s32.totalorder %s92, %s94
      %p101 = scmp.eq.s32.totalorder %s21, 1
      %p102 = por %p100, %p101
      %p103 = scmp.ne.s32.totalorder %s94, %s95
      %p104 = scmp.eq.s32.totalorder %s21, 0
      %p105 = por %p103, %p104
      %p106 = scmp.ne.s32.totalorder %s94, %s95
      %p107 = scmp.eq.s32.totalorder %s22, 1
      %p108 = por %p106, %p107
      %p110 = scmp.ne.s32.totalorder %s95, %s109
      %p111 = scmp.eq.s32.totalorder %s22, 0
      %p112 = por %p110, %p111
      %s113 = ssub.s32 %s16, %s23
      %p114 = scmp.eq.s32.totalorder %s113, 0
      %s116 = sadd.s32 %s115, 1
      %s117 = scalar_select %p114, %s115, %s116
      %p120 = pneg %p114
      %p121 = scmp.eq.s32.totalorder %s16, 1
      %p122 = por %p120, %p121
      %p123 = scmp.ne.s32.totalorder %s115, %s118
      %p124 = scmp.eq.s32.totalorder %s16, 0
      %p125 = por %p123, %p124
      %p126 = scmp.ne.s32.totalorder %s115, %s118
      %p127 = scmp.eq.s32.totalorder %s21, 1
      %p128 = por %p126, %p127
      %p129 = scmp.ne.s32.totalorder %s118, %s119
      %p130 = scmp.eq.s32.totalorder %s21, 0
      %p131 = por %p129, %p130
      %p132 = scmp.ne.s32.totalorder %s118, %s119
      %p133 = scmp.eq.s32.totalorder %s22, 1
      %p134 = por %p132, %p133
      %p136 = scmp.ne.s32.totalorder %s119, %s135
      %p137 = scmp.eq.s32.totalorder %s22, 0
      %p138 = por %p136, %p137
      %p139 = scmp.le.s32.totalorder 1, %s16
      %p140 = scmp.lt.s32.totalorder %s16, 3
      %p141 = pnand %p139, %p140
      %p142 = pneg %p141
      // Predicated region
      $region9: #{tpu_custom_call.1} parent=5 // pred_check
        _
      $region10: #{tpu_custom_call.1} parent=5 // pred_check_branch
        %144 = sbr.rel (%p141) target = $region12
      $region11: #{tpu_custom_call.1} parent=5 // pred_region
        %s145 = ssub.s32 %s16, 1
        // Predicated region
        $region13: #{tpu_custom_call.1} parent=11 // pred_check
          %p146 = pneg %p63
        $region14: #{tpu_custom_call.1} parent=11 // pred_check_branch
          %148 = sbr.rel (%p146) target = $region16
        $region15: #{tpu_custom_call.1} parent=11 // pred_region
          _
        $region16: #{tpu_custom_call.1} parent=11 // pred_fallthru
          _
        // Predicated region
        $region17: #{tpu_custom_call.1} parent=11 // pred_check
          %p149 = pneg %p84
        $region18: #{tpu_custom_call.1} parent=11 // pred_check_branch
          %151 = sbr.rel (%p149) target = $region20
        $region19: #{tpu_custom_call.1} parent=11 // pred_region
          _
        $region20: #{tpu_custom_call.1} parent=11 // pred_fallthru
          _
        // Predicated region
        $region21: #{tpu_custom_call.1} parent=11 // pred_check
          %p152 = pneg %p105
        $region22: #{tpu_custom_call.1} parent=11 // pred_check_branch
          %154 = sbr.rel (%p152) target = $region24
        $region23: #{tpu_custom_call.1} parent=11 // pred_region
          _
        $region24: #{tpu_custom_call.1} parent=11 // pred_fallthru
          _
      $region12: #{tpu_custom_call.1} parent=5 // pred_fallthru
        _
      %p155 = scmp.lt.s32.totalorder %s16, 2
      // Predicated region
      $region25: #{tpu_custom_call.1} parent=5 // pred_check
        %p156 = pneg %p155
      $region26: #{tpu_custom_call.1} parent=5 // pred_check_branch
        %158 = sbr.rel (%p156) target = $region28
      $region27: #{tpu_custom_call.1} parent=5 // pred_region
        // Predicated region
        $region29: #{tpu_custom_call.1} parent=27 // pred_check
          %p159 = pneg %p36
        $region30: #{tpu_custom_call.1} parent=27 // pred_check_branch
          %161 = sbr.rel (%p159) target = $region32
        $region31: #{tpu_custom_call.1} parent=27 // pred_region
          %s162 = sand.u32 %s26, 1
          %s163 = scalar_lea.sflag [#allocation3], %s162
          %s164 = sand.u32 %s26, 1
          %s165 = smul.addr %s164, 8
          %s166 = scalar_lea.vmem [#allocation2], %s165
          %s168 = ssub.s32 128, 128
          %169 = vsyncadd %s163, %s168
          %s170 = smul.addr %s16, 2
          %s171 = smul.addr %s170, 64
          %s172 = scalar_lea.hbm %s0, %s171
          %s174 = sshll.u32 %s166, 4
          %s175 = int_to_ptr.vmem [resolvable:$true] %s174
          %177 = dma.hbm_to_vmem [thread:$0]  %s172, 128, %s175, %s163
        $region32: #{tpu_custom_call.1} parent=27 // pred_fallthru
          _
      $region28: #{tpu_custom_call.1} parent=5 // pred_fallthru
        _
      %p178 = scmp.le.s32.totalorder 1, %s16
      %p179 = scmp.lt.s32.totalorder %s16, 3
      %p180 = pnand %p178, %p179
      %p181 = pneg %p180
      // Predicated region
      $region33: #{tpu_custom_call.1} parent=5 // pred_check
        _
      $region34: #{tpu_custom_call.1} parent=5 // pred_check_branch
        %183 = sbr.rel (%p180) target = $region36
      $region35: #{tpu_custom_call.1} parent=5 // pred_region
        %s184 = ssub.s32 %s16, 1
        %s185 = sand.u32 %s29, 1
        %s186 = scalar_lea.sflag [#allocation3], %s185
        %s187 = sand.u32 %s29, 1
        %s188 = smul.addr %s187, 8
        %s189 = scalar_lea.vmem [#allocation2], %s188
        // Predicated region
        $region37: #{tpu_custom_call.1} parent=35 // pred_check
          %p190 = pneg %p42
        $region38: #{tpu_custom_call.1} parent=35 // pred_check_branch
          %192 = sbr.rel (%p190) target = $region40
        $region39: #{tpu_custom_call.1} parent=35 // pred_region
          %193 = dma.done %s186, 128
        $region40: #{tpu_custom_call.1} parent=35 // pred_fallthru
          _
        %s194 = sand.u32 %s29, 1
        %s195 = scalar_lea.sflag [#allocation3], %s194
        %s196 = sand.u32 %s29, 1
        %s197 = smul.addr %s196, 8
        %s198 = scalar_lea.vmem [#allocation2], %s197
        %p199 = pneg %p42
        %p200 = pneg %p39
        %p201 = pneg %p63
        %p202 = pneg %p60
        %p203 = pneg %p84
        %p204 = pneg %p81
        %p205 = pneg %p105
        %p206 = pneg %p102
        %p207 = pneg %p131
        %p208 = pneg %p128
        %s209 = sand.u32 %s118, 1
        %s210 = scalar_lea.sflag [#allocation4], %s209
        %s211 = sand.u32 %s118, 1
        %s212 = smul.addr %s211, 8
        %s213 = scalar_lea.vmem [#allocation5], %s212
        %v214 = vld [vmem:[%s189] sm:$0xff]
        %v216 = vcombine.high %v214, %v214
        %vm218 = vcmask 1043456
        %v219 = vsel %vm218, %v214, 0.0
        %v220 = vsel %vm218, %v216, 0.0
        %v221 = vadd.f32 %v219, %v220
        %222 = vadd.xlane.f32.xlu0 %v221
        %v223 = vpop.xlane.xlu0 %222
        %v224 = vld [vmem:[%s1] sm:$0xf]
        %vm225 = vcmask 31744
        %v227 = vsel %vm225, %v224, 0
        %v230 = vsel %vm218, %v223, 0
        %232 = vmatprep.subr.mxu0 0.0
        %233 = vmatpush1.msra.mxu0 0.0
        %234 = vmatprep.subr.mxu0 0.0
        %235 = vmatpush1.msra.mxu0 0.0
        %236 = vmatprep.subr.mxu0 0.0
        %237 = vmatpush1.msra.mxu0 0.0
        %238 = vmatprep.subr.mxu0 0.0
        %239 = vmatpush1.msra.mxu0 0.0
        %240 = vmatprep.subr.mxu0 0.0
        %241 = vmatpush1.msra.mxu0 0.0
        %242 = vmatprep.subr.mxu0 0.0
        %243 = vmatpush1.msra.mxu0 0.0
        %244 = vmatprep.subr.mxu0 0.0
        %245 = vmatpush1.msra.mxu0 0.0
        %246 = vmatprep.subr.mxu0 0.0
        %247 = vmatpush1.msra.mxu0 0.0
        %248 = vmatprep.subr.mxu0 0.0
        %249 = vmatpush1.msra.mxu0 0.0
        %250 = vmatprep.subr.mxu0 0.0
        %251 = vmatpush1.msra.mxu0 0.0
        %252 = vmatprep.subr.mxu0 0.0
        %253 = vmatpush1.msra.mxu0 0.0
        %254 = vmatprep.subr.mxu0 0.0
        %255 = vmatpush1.msra.mxu0 0.0
        %256 = vmatprep.subr.mxu0 0.0
        %257 = vmatpush1.msra.mxu0 0.0
        %258 = vmatprep.subr.mxu0 0.0
        %259 = vmatpush1.msra.mxu0 0.0
        %260 = vmatprep.subr.mxu0 0.0
        %261 = vmatpush1.msra.mxu0 0.0
        %262 = vmatprep.subr.mxu0 0.0
        %263 = vmatpush1.msra.mxu0 %v230
        %264 = vmatprep.subr.mxu0 0.0
        %265 = vmatpush2.msra.mxu0 0.0
        %266 = vmatprep.subr.mxu0 0.0
        %267 = vmatpush2.msra.mxu0 0.0
        %268 = vmatprep.subr.mxu0 0.0
        %269 = vmatpush2.msra.mxu0 0.0
        %270 = vmatprep.subr.mxu0 0.0
        %271 = vmatpush2.msra.mxu0 0.0
        %272 = vmatprep.subr.mxu0 0.0
        %273 = vmatpush2.msra.mxu0 0.0
        %274 = vmatprep.subr.mxu0 0.0
        %275 = vmatpush2.msra.mxu0 0.0
        %276 = vmatprep.subr.mxu0 0.0
        %277 = vmatpush2.msra.mxu0 0.0
        %278 = vmatprep.subr.mxu0 0.0
        %279 = vmatpush2.msra.mxu0 0.0
        %280 = vmatprep.subr.mxu0 0.0
        %281 = vmatpush2.msra.mxu0 0.0
        %282 = vmatprep.subr.mxu0 0.0
        %283 = vmatpush2.msra.mxu0 0.0
        %284 = vmatprep.subr.mxu0 0.0
        %285 = vmatpush2.msra.mxu0 0.0
        %286 = vmatprep.subr.mxu0 0.0
        %287 = vmatpush2.msra.mxu0 0.0
        %288 = vmatprep.subr.mxu0 0.0
        %289 = vmatpush2.msra.mxu0 0.0
        %290 = vmatprep.subr.mxu0 0.0
        %291 = vmatpush2.msra.mxu0 0.0
        %292 = vmatprep.subr.mxu0 0.0
        %293 = vmatpush2.msra.mxu0 0.0
        %294 = vmatprep.subr.mxu0 0.0
        %295 = vmatpush2.msra.mxu0 0.0
        %296 = vmatprep.mubr.f32.mxu0 0.0
        %297 = vmatmul.mubr.f32.gmra.mxu0 %v227
        %v298 = vpop.f32.mrf.mxu0
        %v299 = vadd.f32 0.0, %v298
        %v300 = vpop.f32.mrf.mxu0
        %301 = vdwg.mxu0
        %v302 = vmul.f32 %v299, 0.001953125
        %304 = vset.pattern.permute.xlu0 0
        %305 = vperm.xlu0 %304, %v302
        %v306 = vpop.permute.xlu0 %305
        %v308 = vunpack.c.l.s4 839922192
        %v309 = vunpack.c.0.s8 %v308
        %v310 = vlaneseq
        %v311 = vshrl.u32 %v310, 7
        %v312 = vsub.s32 %v309, %v311
        %v313 = vrot.slane %v306, %v312
        %v315 = vsub.f32 %v214, %v313
        %v316 = vmul.f32 %v315, %v315
        %v318 = vcombine.high %v316, %v316
        %v320 = vsel %vm218, %v316, 0.0
        %v321 = vsel %vm218, %v318, 0.0
        %v322 = vadd.f32 %v320, %v321
        %323 = vadd.xlane.f32.xlu0 %v322
        %v324 = vpop.xlane.xlu0 %323
        %v326 = vsel %vm218, %v324, 0
        %328 = vmatprep.subr.mxu0 0.0
        %329 = vmatpush1.msra.mxu0 0.0
        %330 = vmatprep.subr.mxu0 0.0
        %331 = vmatpush1.msra.mxu0 0.0
        %332 = vmatprep.subr.mxu0 0.0
        %333 = vmatpush1.msra.mxu0 0.0
        %334 = vmatprep.subr.mxu0 0.0
        %335 = vmatpush1.msra.mxu0 0.0
        %336 = vmatprep.subr.mxu0 0.0
        %337 = vmatpush1.msra.mxu0 0.0
        %338 = vmatprep.subr.mxu0 0.0
        %339 = vmatpush1.msra.mxu0 0.0
        %340 = vmatprep.subr.mxu0 0.0
        %341 = vmatpush1.msra.mxu0 0.0
        %342 = vmatprep.subr.mxu0 0.0
        %343 = vmatpush1.msra.mxu0 0.0
        %344 = vmatprep.subr.mxu0 0.0
        %345 = vmatpush1.msra.mxu0 0.0
        %346 = vmatprep.subr.mxu0 0.0
        %347 = vmatpush1.msra.mxu0 0.0
        %348 = vmatprep.subr.mxu0 0.0
        %349 = vmatpush1.msra.mxu0 0.0
        %350 = vmatprep.subr.mxu0 0.0
        %351 = vmatpush1.msra.mxu0 0.0
        %352 = vmatprep.subr.mxu0 0.0
        %353 = vmatpush1.msra.mxu0 0.0
        %354 = vmatprep.subr.mxu0 0.0
        %355 = vmatpush1.msra.mxu0 0.0
        %356 = vmatprep.subr.mxu0 0.0
        %357 = vmatpush1.msra.mxu0 0.0
        %358 = vmatprep.subr.mxu0 0.0
        %359 = vmatpush1.msra.mxu0 %v326
        %360 = vmatprep.subr.mxu0 0.0
        %361 = vmatpush2.msra.mxu0 0.0
        %362 = vmatprep.subr.mxu0 0.0
        %363 = vmatpush2.msra.mxu0 0.0
        %364 = vmatprep.subr.mxu0 0.0
        %365 = vmatpush2.msra.mxu0 0.0
        %366 = vmatprep.subr.mxu0 0.0
        %367 = vmatpush2.msra.mxu0 0.0
        %368 = vmatprep.subr.mxu0 0.0
        %369 = vmatpush2.msra.mxu0 0.0
        %370 = vmatprep.subr.mxu0 0.0
        %371 = vmatpush2.msra.mxu0 0.0
        %372 = vmatprep.subr.mxu0 0.0
        %373 = vmatpush2.msra.mxu0 0.0
        %374 = vmatprep.subr.mxu0 0.0
        %375 = vmatpush2.msra.mxu0 0.0
        %376 = vmatprep.subr.mxu0 0.0
        %377 = vmatpush2.msra.mxu0 0.0
        %378 = vmatprep.subr.mxu0 0.0
        %379 = vmatpush2.msra.mxu0 0.0
        %380 = vmatprep.subr.mxu0 0.0
        %381 = vmatpush2.msra.mxu0 0.0
        %382 = vmatprep.subr.mxu0 0.0
        %383 = vmatpush2.msra.mxu0 0.0
        %384 = vmatprep.subr.mxu0 0.0
        %385 = vmatpush2.msra.mxu0 0.0
        %386 = vmatprep.subr.mxu0 0.0
        %387 = vmatpush2.msra.mxu0 0.0
        %388 = vmatprep.subr.mxu0 0.0
        %389 = vmatpush2.msra.mxu0 0.0
        %390 = vmatprep.subr.mxu0 0.0
        %391 = vmatpush2.msra.mxu0 0.0
        %392 = vmatprep.mubr.f32.mxu0 0.0
        %393 = vmatmul.mubr.f32.gmra.mxu0 %v227
        %v394 = vpop.f32.mrf.mxu0
        %v395 = vadd.f32 0.0, %v394
        %v396 = vpop.f32.mrf.mxu0
        %397 = vdwg.mxu0
        %v398 = vmul.f32 %v395, 0.001953125
        %v399 = vadd.f32 %v398, 1e-05
        %v400 = vrsqrt.pop %v399
        %v401 = vld [vmem:[%s2] sm:$0xf]
        %v402 = vmul.f32 %v401, %v400
        %v403 = vld [vmem:[%s3] sm:$0xf]
        %v404 = vmul.f32 %v302, %v402
        %v405 = vsub.f32 %v403, %v404
        %407 = vset.pattern.permute.xlu0 0
        %408 = vperm.xlu0 %407, %v402
        %v409 = vpop.permute.xlu0 %408
        %v411 = vunpack.c.l.s4 839922192
        %v412 = vunpack.c.0.s8 %v411
        %v413 = vlaneseq
        %v414 = vshrl.u32 %v413, 7
        %v415 = vsub.s32 %v412, %v414
        %v416 = vrot.slane %v409, %v415
        %v418 = vmul.f32 %v214, %v416
        %420 = vset.pattern.permute.xlu0 0
        %421 = vperm.xlu0 %420, %v405
        %v422 = vpop.permute.xlu0 %421
        %v424 = vunpack.c.l.s4 839922192
        %v425 = vunpack.c.0.s8 %v424
        %v426 = vlaneseq
        %v427 = vshrl.u32 %v426, 7
        %v428 = vsub.s32 %v425, %v427
        %v429 = vrot.slane %v422, %v428
        %v431 = vadd.f32 %v418, %v429
        %432 = vst [vmem:[%s213] sm:$0xff] %v431
        %s433 = sand.u32 %s118, 1
        %s434 = scalar_lea.sflag [#allocation4], %s433
        %s435 = sand.u32 %s118, 1
        %s436 = smul.addr %s435, 8
        %s437 = scalar_lea.vmem [#allocation5], %s436
        // Predicated region
        $region41: #{tpu_custom_call.1} parent=35 // pred_check
          %p438 = pneg %p128
        $region42: #{tpu_custom_call.1} parent=35 // pred_check_branch
          %440 = sbr.rel (%p438) target = $region44
        $region43: #{tpu_custom_call.1} parent=35 // pred_region
          %s442 = ssub.s32 128, 128
          %443 = vsyncadd %s434, %s442
          %s444 = smul.addr %s21, 2
          %s445 = smul.addr %s444, 64
          %s446 = scalar_lea.hbm %s4, %s445
          %s448 = sshll.u32 %s437, 4
          %s449 = int_to_ptr.vmem [resolvable:$true] %s448
          %451 = dma.vmem_to_hbm [thread:$0]  %s449, 128, %s446, %s434
        $region44: #{tpu_custom_call.1} parent=35 // pred_fallthru
          _
      $region36: #{tpu_custom_call.1} parent=5 // pred_fallthru
        _
      %p452 = scmp.le.s32.totalorder 2, %s16
      // Predicated region
      $region45: #{tpu_custom_call.1} parent=5 // pred_check
        %p453 = pneg %p452
      $region46: #{tpu_custom_call.1} parent=5 // pred_check_branch
        %455 = sbr.rel (%p453) target = $region48
      $region47: #{tpu_custom_call.1} parent=5 // pred_region
        %s456 = ssub.s32 %s16, 2
        // Predicated region
        $region49: #{tpu_custom_call.1} parent=47 // pred_check
          %p457 = pneg %p134
        $region50: #{tpu_custom_call.1} parent=47 // pred_check_branch
          %459 = sbr.rel (%p457) target = $region52
        $region51: #{tpu_custom_call.1} parent=47 // pred_region
          %s460 = sand.u32 %s119, 1
          %s461 = scalar_lea.sflag [#allocation4], %s460
          %s462 = sand.u32 %s119, 1
          %s463 = smul.addr %s462, 8
          %s464 = scalar_lea.vmem [#allocation5], %s463
          %465 = dma.done %s461, 128
        $region52: #{tpu_custom_call.1} parent=47 // pred_fallthru
          _
      $region48: #{tpu_custom_call.1} parent=5 // pred_fallthru
        _
    $region6: #{tpu_custom_call.1} parent=1 // loop_footer
      %s20 = sadd.s32 1, %s16
    $region7: #{tpu_custom_call.1} parent=1 // loop_footer_branch
      %15 = sbr.rel target = $region3
    $region8: #{tpu_custom_call.1} parent=1 // loop_exit
      _
    %466 = vsyncpa [#allocation3], 1
    %s467 = scalar_lea.sflag [#allocation3], 1
    %468 = vsyncpa %s467, 1
    %469 = vsyncpa [#allocation4], 1
    %s470 = scalar_lea.sflag [#allocation4], 1
    %471 = vsyncpa %s470, 1

</llo_original>
